<compile_context>
chip_gen: v5e
topology: v5e:2x2
jax: 0.10.0
libtpu: 0.0.40
codegen_flags: <defaults>
</compile_context>

<pallas_src>
import functools

import jax
import jax.numpy as jnp
from jax import lax
from jax.experimental import pallas as pl
from jax.experimental.pallas import tpu as pltpu

_LANE = 128


def _round_up(x, m):
    return ((x + m - 1) // m) * m


def _mlp_kernel(num_layers, *refs):
    """refs = (x, W0, b0, ..., W_{L-1}, b_{L-1}, WoutT, bout_smem, out)."""
    x_ref = refs[0]
    out_ref = refs[-1]
    params = refs[1:-1]

    h = x_ref[...]  # bf16 (TB, F_pad)

    # Hidden layers: Linear -> ReLU -> Dropout(identity in eval).
    # bf16 operands into the MXU, f32 accumulation + f32 bias/ReLU epilogue
    # (v5e VPU has no bf16); h recast to bf16 only as the next MXU operand.
    for i in range(num_layers):
        w = params[2 * i][...]        # bf16 (in_pad, U_pad)
        b = params[2 * i + 1][...]    # f32  (1, U_pad)
        a = jnp.dot(h, w, preferred_element_type=jnp.float32) + b
        h = jnp.maximum(a, 0.0).astype(jnp.bfloat16)

    # Output layer: Linear(units, 1) -> Sigmoid, as a trans-B matmul so the
    # per-tile result is a lane-dense (1, TB) row (no last-dim-of-1 store).
    wo_t = params[2 * num_layers][...]      # bf16 (1, U_pad)
    bo = params[2 * num_layers + 1][0, 0]   # f32 scalar from SMEM
    logits = lax.dot_general(
        wo_t, h, (((1,), (1,)), ((), ())),
        preferred_element_type=jnp.float32) + bo          # (1, TB) f32
    # Sigmoid via EUP exp + EUP approx reciprocal (frees VALU slots).
    sig = pl.reciprocal(1.0 + jnp.exp(-logits), approx=True)
    out_ref[...] = sig.reshape(out_ref.shape).astype(out_ref.dtype)


def prepare_params(weights, biases):
    """One-time parameter prep: zero-pad to 128 lanes, cast matmul operands to
    bf16, keep biases f32. Padding with zeros is exact (padded units are dead).

    weights: list of (in, out) float32 arrays (transposed vs. PyTorch layout)
    biases:  list of (1, out) float32 arrays
    """
    num_layers = len(weights) - 1
    num_features = weights[0].shape[0]
    num_units = weights[0].shape[1]

    f_pad = _round_up(num_features, _LANE)
    u_pad = _round_up(num_units, _LANE)
    in_pads = [f_pad] + [u_pad] * (num_layers - 1)

    flat = []
    for li in range(num_layers):
        w, b = weights[li], biases[li]
        wp = jnp.zeros((in_pads[li], u_pad), jnp.bfloat16)
        wp = wp.at[: w.shape[0], : w.shape[1]].set(w.astype(jnp.bfloat16))
        bp = jnp.zeros((1, u_pad), jnp.float32)
        bp = bp.at[:, : b.shape[1]].set(b.astype(jnp.float32))
        flat += [wp, bp]

    wo, bo = weights[-1], biases[-1]           # (num_units, 1), (1, 1)
    wo_t = jnp.zeros((1, u_pad), jnp.bfloat16)
    wo_t = wo_t.at[:, :num_units].set(wo.astype(jnp.bfloat16).T)
    bo_p = bo.astype(jnp.float32).reshape(1, 1)
    flat += [wo_t, bo_p]

    return dict(flat=tuple(flat), num_layers=num_layers,
                num_features=num_features, num_units=num_units,
                f_pad=f_pad, u_pad=u_pad, in_pads=tuple(in_pads))


def neural_net_forward(x, prepared, *, tile_batch=512):
    """Fused Pallas MLP forward.

    x:        (batch, num_features) float32
    prepared: output of prepare_params(weights, biases)
    returns:  (batch, 1) float32 in (0, 1)
    """
    num_layers = prepared["num_layers"]
    num_features = prepared["num_features"]
    f_pad = prepared["f_pad"]
    u_pad = prepared["u_pad"]
    in_pads = prepared["in_pads"]
    flat_params = prepared["flat"]

    batch = x.shape[0]
    batch_ru = _round_up(batch, _LANE)

    # Batch tile: multiple of 128 (lane-dense output), large by default, and
    # capped so >= 2 grid steps exist when the batch permits (v7x megacore).
    tb = _round_up(max(1, min(int(tile_batch), batch_ru)), _LANE)
    if batch_ru >= 2 * _LANE and tb > batch_ru // 2:
        tb = _round_up(batch_ru // 2, _LANE)
    batch_pad = _round_up(batch, tb)
    num_tiles = batch_pad // tb

    # Pad / cast activations (zero padding is exact; padded rows sliced off).
    xp = jnp.zeros((batch_pad, f_pad), jnp.bfloat16)
    xp = xp.at[:batch, :num_features].set(x.astype(jnp.bfloat16))

    # BlockSpecs: x/out tiled over the batch grid (double-buffered); params
    # VMEM-resident with single buffering (constant index_map); scalar output
    # bias in SMEM.
    resident = pl.Buffered(buffer_count=1)
    in_specs = [pl.BlockSpec((tb, f_pad), lambda i: (i, 0))]
    for li in range(num_layers):
        in_specs.append(pl.BlockSpec((in_pads[li], u_pad), lambda i: (0, 0),
                                     pipeline_mode=resident))
        in_specs.append(pl.BlockSpec((1, u_pad), lambda i: (0, 0),
                                     pipeline_mode=resident))
    in_specs.append(pl.BlockSpec((1, u_pad), lambda i: (0, 0),
                                 pipeline_mode=resident))                 # WoutT
    in_specs.append(pl.BlockSpec(memory_space=pltpu.MemorySpace.SMEM))    # bout

    out_spec = pl.BlockSpec((1, 1, tb), lambda i: (i, 0, 0))
    out_shape = jax.ShapeDtypeStruct((num_tiles, 1, tb), jnp.float32)

    # Generation-aware VMEM budget:
    #   resident params (single-buffered) + double-buffered x/out tiles
    #   + in-kernel live intermediates (f32 accumulator + bf16 h) + slack,
    # capped at 80% of this chip's VMEM (128 MiB v5e/v6e, 64 MiB/TC v7x).
    param_bytes = sum(int(p.size) * p.dtype.itemsize for p in flat_params[:-1])
    tile_bytes = 2 * (tb * f_pad * 2 + tb * 4)        # x bf16 in, f32 out, x2 buf
    live_bytes = tb * u_pad * (4 + 2) + tb * f_pad * 2  # f32 acc + bf16 h + x copy
    want = param_bytes + tile_bytes + live_bytes + (4 << 20)
    try:
        info = pltpu.get_tpu_info()
        vmem_cap = int(getattr(info, "vmem_capacity_bytes", 64 * 1024 * 1024))
    except Exception:
        vmem_cap = 64 * 1024 * 1024
    vmem_limit = int(min(max(want, 8 << 20), int(0.8 * vmem_cap)))

    kernel = functools.partial(_mlp_kernel, num_layers)
    out = pl.pallas_call(
        kernel,
        grid=(num_tiles,),
        in_specs=in_specs,
        out_specs=out_spec,
        out_shape=out_shape,
        compiler_params=pltpu.CompilerParams(
            dimension_semantics=("parallel",),
            vmem_limit_bytes=vmem_limit,
        ),
    )(xp, *flat_params)

    # Padded rows carry sigmoid(bias-chain) garbage; this slice removes them.
    return out.reshape(batch_pad)[:batch].reshape(batch, 1)


def init_params(key, num_features, num_layers, num_units):
    """nn.Linear-style init (uniform +/- 1/sqrt(fan_in)); weights stored (in, out)."""
    weights, biases = [], []
    in_dim = num_features
    dims = [num_units] * num_layers + [1]
    for out_dim in dims:
        key, kw, kb = jax.random.split(key, 3)
        bound = 1.0 / jnp.sqrt(jnp.float32(in_dim))
        w = jax.random.uniform(kw, (in_dim, out_dim), jnp.float32, -bound, bound)
        b = jax.random.uniform(kb, (1, out_dim), jnp.float32, -bound, bound)
        weights.append(w)
        biases.append(b)
        in_dim = out_dim
    return weights, biases


def reference_forward(x, weights, biases):
    h = x
    for i in range(len(weights) - 1):
        h = jnp.maximum(h @ weights[i] + biases[i], 0.0)
    logits = h @ weights[-1] + biases[-1]
    return jax.nn.sigmoid(logits)


if __name__ == "__main__":
    num_features = 32
    num_layers = 2
    num_units = 32

    key = jax.random.PRNGKey(0)
    key, kx = jax.random.split(key)
    weights, biases = init_params(key, num_features, num_layers, num_units)
    prepped = prepare_params(weights, biases)   # one-time parameter prep

    # Small batch: single lane-aligned tile (batch 48 padded to 128).
    x_small = jax.random.normal(kx, (48, num_features), jnp.float32)
    ref_small = reference_forward(x_small, weights, biases)
    out_small = jax.block_until_ready(neural_net_forward(x_small, prepped))
    assert out_small.shape == (48, 1), out_small.shape
    assert bool(jnp.all(jnp.isfinite(out_small)))
    assert jnp.allclose(out_small, ref_small, atol=3e-2, rtol=3e-2)

    # Larger batch: >= 2 grid steps (megacore path) + padding slice exercised.
    key, kx2 = jax.random.split(key)
    x_big = jax.random.normal(kx2, (272, num_features), jnp.float32)
    ref_big = reference_forward(x_big, weights, biases)
    out_big = jax.block_until_ready(
        neural_net_forward(x_big, prepped, tile_batch=512))
    assert out_big.shape == (272, 1), out_big.shape
    assert bool(jnp.all(jnp.isfinite(out_big)))
    assert jnp.allclose(out_big, ref_big, atol=3e-2, rtol=3e-2)

    print("KERNEL_OK")
</pallas_src>

<mosaic_0001>
module attributes {stable_mosaic.version = 11 : i64} {
  func.func @_mlp_kernel(%arg0: i32, %arg1: memref<128x128xbf16, #tpu.memory_space<vmem>>, %arg2: memref<128x128xbf16, #tpu.memory_space<vmem>>, %arg3: memref<1x128xf32, #tpu.memory_space<vmem>>, %arg4: memref<128x128xbf16, #tpu.memory_space<vmem>>, %arg5: memref<1x128xf32, #tpu.memory_space<vmem>>, %arg6: memref<1x128xbf16, #tpu.memory_space<vmem>>, %arg7: memref<1x1xf32, #tpu.memory_space<smem>>, %arg8: memref<1x1x128xf32, #tpu.memory_space<vmem>>) attributes {dimension_semantics = [#tpu.dimension_semantics<parallel>], iteration_bounds = array<i64: 1>, scalar_prefetch = 0 : i64, scratch_operands = 0 : i64, tpu.core_type = #tpu.core_type<tc>, window_params = [{transform_indices = @transform_0, window_bounds = array<i64: 128, 128>}, {pipeline_mode = #tpu.pipeline_mode<synchronous>, transform_indices = @transform_1, window_bounds = array<i64: 128, 128>}, {pipeline_mode = #tpu.pipeline_mode<synchronous>, transform_indices = @transform_2, window_bounds = array<i64: 1, 128>}, {pipeline_mode = #tpu.pipeline_mode<synchronous>, transform_indices = @transform_3, window_bounds = array<i64: 128, 128>}, {pipeline_mode = #tpu.pipeline_mode<synchronous>, transform_indices = @transform_4, window_bounds = array<i64: 1, 128>}, {pipeline_mode = #tpu.pipeline_mode<synchronous>, transform_indices = @transform_5, window_bounds = array<i64: 1, 128>}, {transform_indices = @transform_6, window_bounds = array<i64: 1, 1>}, {transform_indices = @transform_7, window_bounds = array<i64: 1, 1, 128>}]} {
    %c0 = arith.constant 0 : index
    %c0_0 = arith.constant 0 : index
    %0 = vector.load %arg1[%c0, %c0_0] : memref<128x128xbf16, #tpu.memory_space<vmem>>, vector<128x128xbf16>
    %c0_1 = arith.constant 0 : index
    %c0_2 = arith.constant 0 : index
    %1 = vector.load %arg2[%c0_1, %c0_2] : memref<128x128xbf16, #tpu.memory_space<vmem>>, vector<128x128xbf16>
    %c0_3 = arith.constant 0 : index
    %c0_4 = arith.constant 0 : index
    %2 = vector.load %arg3[%c0_3, %c0_4] : memref<1x128xf32, #tpu.memory_space<vmem>>, vector<1x128xf32>
    %cst = arith.constant dense<0.000000e+00> : vector<128x128xf32>
    %3 = tpu.matmul %0, %1, %cst {dimension_numbers = #tpu.dot_dimension_numbers<[1], [0], [0], [1], [0, 0, 1, 1], [], []>} : vector<128x128xbf16>, vector<128x128xbf16>, vector<128x128xf32> -> vector<128x128xf32>
    %4 = vector.broadcast %2 : vector<1x128xf32> to vector<128x128xf32>
    %5 = arith.addf %3, %4 : vector<128x128xf32>
    %cst_5 = arith.constant 0.000000e+00 : f32
    %6 = vector.broadcast %cst_5 : f32 to vector<128x128xf32>
    %7 = arith.maximumf %5, %6 : vector<128x128xf32>
    %8 = arith.truncf %7 : vector<128x128xf32> to vector<128x128xbf16>
    %c0_6 = arith.constant 0 : index
    %c0_7 = arith.constant 0 : index
    %9 = vector.load %arg4[%c0_6, %c0_7] : memref<128x128xbf16, #tpu.memory_space<vmem>>, vector<128x128xbf16>
    %c0_8 = arith.constant 0 : index
    %c0_9 = arith.constant 0 : index
    %10 = vector.load %arg5[%c0_8, %c0_9] : memref<1x128xf32, #tpu.memory_space<vmem>>, vector<1x128xf32>
    %cst_10 = arith.constant dense<0.000000e+00> : vector<128x128xf32>
    %11 = tpu.matmul %8, %9, %cst_10 {dimension_numbers = #tpu.dot_dimension_numbers<[1], [0], [0], [1], [0, 0, 1, 1], [], []>} : vector<128x128xbf16>, vector<128x128xbf16>, vector<128x128xf32> -> vector<128x128xf32>
    %12 = vector.broadcast %10 : vector<1x128xf32> to vector<128x128xf32>
    %13 = arith.addf %11, %12 : vector<128x128xf32>
    %cst_11 = arith.constant 0.000000e+00 : f32
    %14 = vector.broadcast %cst_11 : f32 to vector<128x128xf32>
    %15 = arith.maximumf %13, %14 : vector<128x128xf32>
    %16 = arith.truncf %15 : vector<128x128xf32> to vector<128x128xbf16>
    %c0_12 = arith.constant 0 : index
    %c0_13 = arith.constant 0 : index
    %17 = vector.load %arg6[%c0_12, %c0_13] : memref<1x128xbf16, #tpu.memory_space<vmem>>, vector<1x128xbf16>
    %c0_14 = arith.constant 0 : index
    %c0_15 = arith.constant 0 : index
    %18 = memref.load %arg7[%c0_14, %c0_15] : memref<1x1xf32, #tpu.memory_space<smem>>
    %cst_16 = arith.constant dense<0.000000e+00> : vector<1x128xf32>
    %19 = tpu.matmul %17, %16, %cst_16 {dimension_numbers = #tpu.dot_dimension_numbers<[1], [1], [0], [0], [0, 0, 1, 0], [], []>} : vector<1x128xbf16>, vector<128x128xbf16>, vector<1x128xf32> -> vector<1x128xf32>
    %20 = vector.broadcast %18 : f32 to vector<1x128xf32>
    %21 = arith.addf %19, %20 : vector<1x128xf32>
    %cst_17 = arith.constant 0.000000e+00 : f32
    %22 = vector.broadcast %cst_17 : f32 to vector<1x128xf32>
    %23 = arith.subf %22, %21 : vector<1x128xf32>
    %24 = math.exp %23 : vector<1x128xf32>
    %cst_18 = arith.constant 1.000000e+00 : f32
    %25 = vector.broadcast %cst_18 : f32 to vector<1x128xf32>
    %26 = arith.addf %25, %24 : vector<1x128xf32>
    %27 = tpu.reciprocal %26 {approx = true} : vector<1x128xf32> -> vector<1x128xf32>
    %28 = vector.shape_cast %27 : vector<1x128xf32> to vector<1x1x128xf32>
    %c0_19 = arith.constant 0 : index
    %c0_20 = arith.constant 0 : index
    %c0_21 = arith.constant 0 : index
    %29 = vector.load %arg8[%c0_19, %c0_20, %c0_21] : memref<1x1x128xf32, #tpu.memory_space<vmem>>, vector<1x1x128xf32>
    tpu.vector_store %arg8[%c0_19, %c0_20, %c0_21], %28 {strides = array<i32>} : memref<1x1x128xf32, #tpu.memory_space<vmem>>, vector<1x1x128xf32>,
    return
  }
  func.func @transform_0(%arg0: i32) -> (i32, i32) {
    %c0_i32 = arith.constant 0 : i32
    %c0_i32_0 = arith.constant 0 : i32
    return %arg0, %c0_i32 : i32, i32
  }
  func.func @transform_1(%arg0: i32) -> (i32, i32) {
    %c0_i32 = arith.constant 0 : i32
    %c0_i32_0 = arith.constant 0 : i32
    %c0_i32_1 = arith.constant 0 : i32
    return %c0_i32, %c0_i32_0 : i32, i32
  }
  func.func @transform_2(%arg0: i32) -> (i32, i32) {
    %c0_i32 = arith.constant 0 : i32
    %c0_i32_0 = arith.constant 0 : i32
    %c0_i32_1 = arith.constant 0 : i32
    return %c0_i32, %c0_i32_0 : i32, i32
  }
  func.func @transform_3(%arg0: i32) -> (i32, i32) {
    %c0_i32 = arith.constant 0 : i32
    %c0_i32_0 = arith.constant 0 : i32
    %c0_i32_1 = arith.constant 0 : i32
    return %c0_i32, %c0_i32_0 : i32, i32
  }
  func.func @transform_4(%arg0: i32) -> (i32, i32) {
    %c0_i32 = arith.constant 0 : i32
    %c0_i32_0 = arith.constant 0 : i32
    %c0_i32_1 = arith.constant 0 : i32
    return %c0_i32, %c0_i32_0 : i32, i32
  }
  func.func @transform_5(%arg0: i32) -> (i32, i32) {
    %c0_i32 = arith.constant 0 : i32
    %c0_i32_0 = arith.constant 0 : i32
    %c0_i32_1 = arith.constant 0 : i32
    return %c0_i32, %c0_i32_0 : i32, i32
  }
  func.func @transform_6(%arg0: i32) -> (i32, i32) {
    %c0_i32 = arith.constant 0 : i32
    %c0_i32_0 = arith.constant 0 : i32
    %c0_i32_1 = arith.constant 0 : i32
    return %c0_i32, %c0_i32_0 : i32, i32
  }
  func.func @transform_7(%arg0: i32) -> (i32, i32, i32) {
    %c0_i32 = arith.constant 0 : i32
    %c0_i32_0 = arith.constant 0 : i32
    %c0_i32_1 = arith.constant 0 : i32
    return %arg0, %c0_i32, %c0_i32_0 : i32, i32, i32
  }
}

</mosaic_0001>

<llo_original>
// kernel: tpu_custom_call.1
$region0: #{tpu_custom_call.1}
  #allocation0 [shape = 'u32[]', space=smem, size = 0x4, offset = 0x4, fixed_abs, tag = 'smem constant byte address 0x4 - core index']
  #allocation1 [shape = 'u32[72,128]{1,0:T(1,128)}', space=vmem, size = 0x9000, scoped, tag = 'internal scratch']
  #allocation2 [shape = 'f32[1,1]{1,0:T(1,128)S(6)}', space=smem, size = 0x200, scoped, tag = 'scoped memory for tpu_custom_call.1']
  %s0 = inlined_call_operand.hbm [shape: bf16[128,128], index: 0, kind: input, shape index: {}]
  %s1 = inlined_call_operand.hbm [shape: bf16[128,128], index: 1, kind: input, shape index: {}]
  %s2 = inlined_call_operand.vmem [shape: f32[1,128], index: 2, kind: input, shape index: {}]
  %s3 = inlined_call_operand.hbm [shape: bf16[128,128], index: 3, kind: input, shape index: {}]
  %s4 = inlined_call_operand.vmem [shape: f32[1,128], index: 4, kind: input, shape index: {}]
  %s5 = inlined_call_operand.vmem [shape: bf16[1,128], index: 5, kind: input, shape index: {}]
  %s6 = inlined_call_operand.<no memory space> [shape: f32[1,1], index: 6, kind: input, shape index: {}]
  %s7 = inlined_call_operand.hbm [shape: f32[1,1,128], index: 7, kind: output, shape index: {}]
  %s8 = sld [smem:[#allocation0]]
  $region50: #{tpu_custom_call.1} parent=0
    _
  %s10 = ssub.s32 1, %s8
  %s11 = scalar_select 0, %s10, %s8
  %12 = sst [smem:[#allocation2]] %s6
  $region1: #{tpu_custom_call.1} parent=0
    #allocation3 [shape = 'u8[32768]{0}', space=vmem, size = 0x8000, scoped, tag = 'input window, operand 0, single buffered']
    #allocation4 [shape = 's32[1]{0}', space=sflag, size = 0x4, scoped, tag = 'scoped memory for tpu_custom_call.1']
    #allocation5 [shape = 's32[1]{0}', space=sflag, size = 0x4, scoped, tag = 'scoped memory for tpu_custom_call.1']
    #allocation6 [shape = 'u8[32768]{0}', space=vmem, size = 0x8000, scoped, tag = 'input window, operand 1, single buffered']
    #allocation7 [shape = 's32[1]{0}', space=sflag, size = 0x4, scoped, tag = 'scoped memory for tpu_custom_call.1']
    #allocation8 [shape = 'u8[32768]{0}', space=vmem, size = 0x8000, scoped, tag = 'input window, operand 3, single buffered']
    #allocation9 [shape = 'u8[512]{0}', space=vmem, size = 0x400, scoped, tag = 'output window, operand 0, single buffered']
    %13 = vsyncpa [#allocation4], 0
    %14 = vsyncpa [#allocation7], 0
    %15 = vsyncpa [#allocation5], 0
    // Predicated region
    $region2: #{tpu_custom_call.1} parent=1 // pred_check
      _
    $region3: #{tpu_custom_call.1} parent=1 // pred_check_branch
      %17 = sbr.rel (0) target = $region5
    $region4: #{tpu_custom_call.1} parent=1 // pred_region
      %19 = vsyncadd [#allocation4], 0
      %s20 = sshll.u32 %s0, 4
      %s21 = int_to_ptr.hbm [resolvable:$true] %s20
      %s22 = sshll.u32 [#allocation3], 4
      %s23 = int_to_ptr.vmem [resolvable:$true] %s22
      %28 = dma.hbm_to_vmem [thread:$0]  %s21, 1024, %s23, [#allocation4], 64, 64, 4
    $region5: #{tpu_custom_call.1} parent=1 // pred_fallthru
      _
    // Predicated region
    $region6: #{tpu_custom_call.1} parent=1 // pred_check
      _
    $region7: #{tpu_custom_call.1} parent=1 // pred_check_branch
      %30 = sbr.rel (0) target = $region9
    $region8: #{tpu_custom_call.1} parent=1 // pred_region
      %32 = vsyncadd [#allocation7], 0
      %s33 = sshll.u32 %s1, 4
      %s34 = int_to_ptr.hbm [resolvable:$true] %s33
      %s35 = sshll.u32 [#allocation6], 4
      %s36 = int_to_ptr.vmem [resolvable:$true] %s35
      %41 = dma.hbm_to_vmem [thread:$0]  %s34, 1024, %s36, [#allocation7], 64, 64, 4
    $region9: #{tpu_custom_call.1} parent=1 // pred_fallthru
      _
    // Predicated region
    $region10: #{tpu_custom_call.1} parent=1 // pred_check
      _
    $region11: #{tpu_custom_call.1} parent=1 // pred_check_branch
      %43 = sbr.rel (0) target = $region13
    $region12: #{tpu_custom_call.1} parent=1 // pred_region
      _
    $region13: #{tpu_custom_call.1} parent=1 // pred_fallthru
      _
    // Predicated region
    $region14: #{tpu_custom_call.1} parent=1 // pred_check
      _
    $region15: #{tpu_custom_call.1} parent=1 // pred_check_branch
      %45 = sbr.rel (0) target = $region17
    $region16: #{tpu_custom_call.1} parent=1 // pred_region
      %47 = vsyncadd [#allocation7], 0
      %s48 = sshll.u32 %s3, 4
      %s49 = int_to_ptr.hbm [resolvable:$true] %s48
      %s50 = sshll.u32 [#allocation8], 4
      %s51 = int_to_ptr.vmem [resolvable:$true] %s50
      %56 = dma.hbm_to_vmem [thread:$0]  %s49, 1024, %s51, [#allocation7], 64, 64, 4
    $region17: #{tpu_custom_call.1} parent=1 // pred_fallthru
      _
    // Predicated region
    $region18: #{tpu_custom_call.1} parent=1 // pred_check
      _
    $region19: #{tpu_custom_call.1} parent=1 // pred_check_branch
      %58 = sbr.rel (0) target = $region21
    $region20: #{tpu_custom_call.1} parent=1 // pred_region
      _
    $region21: #{tpu_custom_call.1} parent=1 // pred_fallthru
      _
    // Predicated region
    $region22: #{tpu_custom_call.1} parent=1 // pred_check
      _
    $region23: #{tpu_custom_call.1} parent=1 // pred_check_branch
      %60 = sbr.rel (0) target = $region25
    $region24: #{tpu_custom_call.1} parent=1 // pred_region
      _
    $region25: #{tpu_custom_call.1} parent=1 // pred_fallthru
      _
    // Predicated region
    $region26: #{tpu_custom_call.1} parent=1 // pred_check
      _
    $region27: #{tpu_custom_call.1} parent=1 // pred_check_branch
      %62 = sbr.rel (0) target = $region29
    $region28: #{tpu_custom_call.1} parent=1 // pred_region
      _
    $region29: #{tpu_custom_call.1} parent=1 // pred_fallthru
      _
    // Predicated region
    $region30: #{tpu_custom_call.1} parent=1 // pred_check
      _
    $region31: #{tpu_custom_call.1} parent=1 // pred_check_branch
      %64 = sbr.rel (0) target = $region33
    $region32: #{tpu_custom_call.1} parent=1 // pred_region
      %66 = dma.done [#allocation4], 1024
    $region33: #{tpu_custom_call.1} parent=1 // pred_fallthru
      _
    // Predicated region
    $region34: #{tpu_custom_call.1} parent=1 // pred_check
      _
    $region35: #{tpu_custom_call.1} parent=1 // pred_check_branch
      %68 = sbr.rel (0) target = $region37
    $region36: #{tpu_custom_call.1} parent=1 // pred_region
      %70 = dma.done [#allocation7], 1024
    $region37: #{tpu_custom_call.1} parent=1 // pred_fallthru
      _
    // Predicated region
    $region38: #{tpu_custom_call.1} parent=1 // pred_check
      _
    $region39: #{tpu_custom_call.1} parent=1 // pred_check_branch
      %72 = sbr.rel (0) target = $region41
    $region40: #{tpu_custom_call.1} parent=1 // pred_region
      %74 = dma.done [#allocation7], 1024
    $region41: #{tpu_custom_call.1} parent=1 // pred_fallthru
      _
    %v75 = vld [vmem:[#allocation3] sm:$0xf]
    %v76 = vld [vmem:[#allocation3 + $0x4] sm:$0xf]
    %v77 = vld [vmem:[#allocation3 + $0x8] sm:$0xf]
    %v78 = vld [vmem:[#allocation3 + $0xc] sm:$0xf]
    %v79 = vld [vmem:[#allocation3 + $0x10] sm:$0xf]
    %v80 = vld [vmem:[#allocation3 + $0x14] sm:$0xf]
    %v81 = vld [vmem:[#allocation3 + $0x18] sm:$0xf]
    %v82 = vld [vmem:[#allocation3 + $0x1c] sm:$0xf]
    %v83 = vld [vmem:[#allocation3 + $0x20] sm:$0xf]
    %v84 = vld [vmem:[#allocation3 + $0x24] sm:$0xf]
    %v85 = vld [vmem:[#allocation3 + $0x28] sm:$0xf]
    %v86 = vld [vmem:[#allocation3 + $0x2c] sm:$0xf]
    %v87 = vld [vmem:[#allocation3 + $0x30] sm:$0xf]
    %v88 = vld [vmem:[#allocation3 + $0x34] sm:$0xf]
    %v89 = vld [vmem:[#allocation3 + $0x38] sm:$0xf]
    %v90 = vld [vmem:[#allocation3 + $0x3c] sm:$0xf]
    %v91 = vld [vmem:[#allocation6] sm:$0xf]
    %v92 = vld [vmem:[#allocation6 + $0x4] sm:$0xf]
    %v93 = vld [vmem:[#allocation6 + $0x8] sm:$0xf]
    %v94 = vld [vmem:[#allocation6 + $0xc] sm:$0xf]
    %v95 = vld [vmem:[#allocation6 + $0x10] sm:$0xf]
    %v96 = vld [vmem:[#allocation6 + $0x14] sm:$0xf]
    %v97 = vld [vmem:[#allocation6 + $0x18] sm:$0xf]
    %v98 = vld [vmem:[#allocation6 + $0x1c] sm:$0xf]
    %v99 = vld [vmem:[#allocation6 + $0x20] sm:$0xf]
    %v100 = vld [vmem:[#allocation6 + $0x24] sm:$0xf]
    %v101 = vld [vmem:[#allocation6 + $0x28] sm:$0xf]
    %v102 = vld [vmem:[#allocation6 + $0x2c] sm:$0xf]
    %v103 = vld [vmem:[#allocation6 + $0x30] sm:$0xf]
    %v104 = vld [vmem:[#allocation6 + $0x34] sm:$0xf]
    %v105 = vld [vmem:[#allocation6 + $0x38] sm:$0xf]
    %v106 = vld [vmem:[#allocation6 + $0x3c] sm:$0xf]
    %v107 = vld [vmem:[%s2] sm:$0x1]
    %v109 = vperm.slane %v107, 0
    %v127 = vunpack.c.l.b16 %v75
    %v128 = vunpack.c.l.b16 %v76
    %v129 = vunpack.c.l.b16 %v77
    %v130 = vunpack.c.l.b16 %v78
    %v131 = vunpack.c.l.b16 %v79
    %v132 = vunpack.c.l.b16 %v80
    %v133 = vunpack.c.l.b16 %v81
    %v134 = vunpack.c.l.b16 %v82
    %v135 = vunpack.c.l.b16 %v83
    %v136 = vunpack.c.l.b16 %v84
    %v137 = vunpack.c.l.b16 %v85
    %v138 = vunpack.c.l.b16 %v86
    %v139 = vunpack.c.l.b16 %v87
    %v140 = vunpack.c.l.b16 %v88
    %v141 = vunpack.c.l.b16 %v89
    %v142 = vunpack.c.l.b16 %v90
    %v143 = vpack.c.b16 %v128, %v127
    %v144 = vpack.c.b16 %v130, %v129
    %v145 = vpack.c.b16 %v132, %v131
    %v146 = vpack.c.b16 %v134, %v133
    %v147 = vpack.c.b16 %v136, %v135
    %v148 = vpack.c.b16 %v138, %v137
    %v149 = vpack.c.b16 %v140, %v139
    %v150 = vpack.c.b16 %v142, %v141
    %v175 = vunpack.c.l.b16 %v91
    %v176 = vunpack.c.l.b16 %v92
    %v177 = vunpack.c.l.b16 %v93
    %v178 = vunpack.c.l.b16 %v94
    %v179 = vunpack.c.l.b16 %v95
    %v180 = vunpack.c.l.b16 %v96
    %v181 = vunpack.c.l.b16 %v97
    %v182 = vunpack.c.l.b16 %v98
    %v183 = vunpack.c.l.b16 %v99
    %v184 = vunpack.c.l.b16 %v100
    %v185 = vunpack.c.l.b16 %v101
    %v186 = vunpack.c.l.b16 %v102
    %v187 = vunpack.c.l.b16 %v103
    %v188 = vunpack.c.l.b16 %v104
    %v189 = vunpack.c.l.b16 %v105
    %v190 = vunpack.c.l.b16 %v106
    %v191 = vpack.c.b16 %v176, %v175
    %v192 = vpack.c.b16 %v178, %v177
    %v193 = vpack.c.b16 %v180, %v179
    %v194 = vpack.c.b16 %v182, %v181
    %v195 = vpack.c.b16 %v184, %v183
    %v196 = vpack.c.b16 %v186, %v185
    %v197 = vpack.c.b16 %v188, %v187
    %v198 = vpack.c.b16 %v190, %v189
    %207 = vmatpush.bf16.msra.mxu0 %v198
    %208 = vmatpush.bf16.msra.mxu0 %v197
    %209 = vmatpush.bf16.msra.mxu0 %v196
    %210 = vmatpush.bf16.msra.mxu0 %v195
    %211 = vmatpush.bf16.msra.mxu0 %v194
    %212 = vmatpush.bf16.msra.mxu0 %v193
    %213 = vmatpush.bf16.msra.mxu0 %v192
    %214 = vmatpush.bf16.msra.mxu0 %v191
    %215 = vmatmul.bf16.gmra.mxu0 %v143
    %v216 = vpop.f32.mrf.mxu0
    %v217 = vadd.f32 %v109, %v216
    %v218 = vpop.f32.mrf.mxu0
    %v219 = vadd.f32 %v109, %v218
    %220 = vmatmul.bf16.gmra.mxu0 %v144
    %v221 = vpop.f32.mrf.mxu0
    %v222 = vadd.f32 %v109, %v221
    %v223 = vpop.f32.mrf.mxu0
    %v224 = vadd.f32 %v109, %v223
    %225 = vmatmul.bf16.gmra.mxu0 %v145
    %v226 = vpop.f32.mrf.mxu0
    %v227 = vadd.f32 %v109, %v226
    %v228 = vpop.f32.mrf.mxu0
    %v229 = vadd.f32 %v109, %v228
    %230 = vmatmul.bf16.gmra.mxu0 %v146
    %v231 = vpop.f32.mrf.mxu0
    %v232 = vadd.f32 %v109, %v231
    %v233 = vpop.f32.mrf.mxu0
    %v234 = vadd.f32 %v109, %v233
    %235 = vmatmul.bf16.gmra.mxu0 %v147
    %v236 = vpop.f32.mrf.mxu0
    %v237 = vadd.f32 %v109, %v236
    %v238 = vpop.f32.mrf.mxu0
    %v239 = vadd.f32 %v109, %v238
    %240 = vmatmul.bf16.gmra.mxu0 %v148
    %v241 = vpop.f32.mrf.mxu0
    %v242 = vadd.f32 %v109, %v241
    %v243 = vpop.f32.mrf.mxu0
    %v244 = vadd.f32 %v109, %v243
    %245 = vmatmul.bf16.gmra.mxu0 %v149
    %v246 = vpop.f32.mrf.mxu0
    %v247 = vadd.f32 %v109, %v246
    %v248 = vpop.f32.mrf.mxu0
    %v249 = vadd.f32 %v109, %v248
    %250 = vmatmul.bf16.gmra.mxu0 %v150
    %v251 = vpop.f32.mrf.mxu0
    %v252 = vadd.f32 %v109, %v251
    %v253 = vpop.f32.mrf.mxu0
    %v254 = vadd.f32 %v109, %v253
    %255 = vdwg.mxu0
    %v256 = vmax.f32 %v217, 0.0
    %v257 = vmax.f32 %v219, 0.0
    %v258 = vmax.f32 %v222, 0.0
    %v259 = vmax.f32 %v224, 0.0
    %v260 = vmax.f32 %v227, 0.0
    %v261 = vmax.f32 %v229, 0.0
    %v262 = vmax.f32 %v232, 0.0
    %v263 = vmax.f32 %v234, 0.0
    %v264 = vmax.f32 %v237, 0.0
    %v265 = vmax.f32 %v239, 0.0
    %v266 = vmax.f32 %v242, 0.0
    %v267 = vmax.f32 %v244, 0.0
    %v268 = vmax.f32 %v247, 0.0
    %v269 = vmax.f32 %v249, 0.0
    %v270 = vmax.f32 %v252, 0.0
    %v271 = vmax.f32 %v254, 0.0
    %v272 = vpack.c.bf16 %v257, %v256
    %v273 = vpack.c.bf16 %v259, %v258
    %v274 = vpack.c.bf16 %v261, %v260
    %v275 = vpack.c.bf16 %v263, %v262
    %v276 = vpack.c.bf16 %v265, %v264
    %v277 = vpack.c.bf16 %v267, %v266
    %v278 = vpack.c.bf16 %v269, %v268
    %v279 = vpack.c.bf16 %v271, %v270
    %v280 = vld [vmem:[#allocation8] sm:$0xf]
    %v281 = vld [vmem:[#allocation8 + $0x4] sm:$0xf]
    %v282 = vld [vmem:[#allocation8 + $0x8] sm:$0xf]
    %v283 = vld [vmem:[#allocation8 + $0xc] sm:$0xf]
    %v284 = vld [vmem:[#allocation8 + $0x10] sm:$0xf]
    %v285 = vld [vmem:[#allocation8 + $0x14] sm:$0xf]
    %v286 = vld [vmem:[#allocation8 + $0x18] sm:$0xf]
    %v287 = vld [vmem:[#allocation8 + $0x1c] sm:$0xf]
    %v288 = vld [vmem:[#allocation8 + $0x20] sm:$0xf]
    %v289 = vld [vmem:[#allocation8 + $0x24] sm:$0xf]
    %v290 = vld [vmem:[#allocation8 + $0x28] sm:$0xf]
    %v291 = vld [vmem:[#allocation8 + $0x2c] sm:$0xf]
    %v292 = vld [vmem:[#allocation8 + $0x30] sm:$0xf]
    %v293 = vld [vmem:[#allocation8 + $0x34] sm:$0xf]
    %v294 = vld [vmem:[#allocation8 + $0x38] sm:$0xf]
    %v295 = vld [vmem:[#allocation8 + $0x3c] sm:$0xf]
    %v296 = vld [vmem:[%s4] sm:$0x1]
    %v298 = vperm.slane %v296, 0
    %v316 = vunpack.c.l.b16 %v280
    %v317 = vunpack.c.l.b16 %v281
    %v318 = vunpack.c.l.b16 %v282
    %v319 = vunpack.c.l.b16 %v283
    %v320 = vunpack.c.l.b16 %v284
    %v321 = vunpack.c.l.b16 %v285
    %v322 = vunpack.c.l.b16 %v286
    %v323 = vunpack.c.l.b16 %v287
    %v324 = vunpack.c.l.b16 %v288
    %v325 = vunpack.c.l.b16 %v289
    %v326 = vunpack.c.l.b16 %v290
    %v327 = vunpack.c.l.b16 %v291
    %v328 = vunpack.c.l.b16 %v292
    %v329 = vunpack.c.l.b16 %v293
    %v330 = vunpack.c.l.b16 %v294
    %v331 = vunpack.c.l.b16 %v295
    %v332 = vpack.c.b16 %v317, %v316
    %v333 = vpack.c.b16 %v319, %v318
    %v334 = vpack.c.b16 %v321, %v320
    %v335 = vpack.c.b16 %v323, %v322
    %v336 = vpack.c.b16 %v325, %v324
    %v337 = vpack.c.b16 %v327, %v326
    %v338 = vpack.c.b16 %v329, %v328
    %v339 = vpack.c.b16 %v331, %v330
    %348 = vmatpush.bf16.msra.mxu0 %v339
    %349 = vmatpush.bf16.msra.mxu0 %v338
    %350 = vmatpush.bf16.msra.mxu0 %v337
    %351 = vmatpush.bf16.msra.mxu0 %v336
    %352 = vmatpush.bf16.msra.mxu0 %v335
    %353 = vmatpush.bf16.msra.mxu0 %v334
    %354 = vmatpush.bf16.msra.mxu0 %v333
    %355 = vmatpush.bf16.msra.mxu0 %v332
    %356 = vmatmul.bf16.gmra.mxu0 %v272
    %v357 = vpop.f32.mrf.mxu0
    %v358 = vadd.f32 %v298, %v357
    %v359 = vpop.f32.mrf.mxu0
    %v360 = vadd.f32 %v298, %v359
    %361 = vmatmul.bf16.gmra.mxu0 %v273
    %v362 = vpop.f32.mrf.mxu0
    %v363 = vadd.f32 %v298, %v362
    %v364 = vpop.f32.mrf.mxu0
    %v365 = vadd.f32 %v298, %v364
    %366 = vmatmul.bf16.gmra.mxu0 %v274
    %v367 = vpop.f32.mrf.mxu0
    %v368 = vadd.f32 %v298, %v367
    %v369 = vpop.f32.mrf.mxu0
    %v370 = vadd.f32 %v298, %v369
    %371 = vmatmul.bf16.gmra.mxu0 %v275
    %v372 = vpop.f32.mrf.mxu0
    %v373 = vadd.f32 %v298, %v372
    %v374 = vpop.f32.mrf.mxu0
    %v375 = vadd.f32 %v298, %v374
    %376 = vmatmul.bf16.gmra.mxu0 %v276
    %v377 = vpop.f32.mrf.mxu0
    %v378 = vadd.f32 %v298, %v377
    %v379 = vpop.f32.mrf.mxu0
    %v380 = vadd.f32 %v298, %v379
    %381 = vmatmul.bf16.gmra.mxu0 %v277
    %v382 = vpop.f32.mrf.mxu0
    %v383 = vadd.f32 %v298, %v382
    %v384 = vpop.f32.mrf.mxu0
    %v385 = vadd.f32 %v298, %v384
    %386 = vmatmul.bf16.gmra.mxu0 %v278
    %v387 = vpop.f32.mrf.mxu0
    %v388 = vadd.f32 %v298, %v387
    %v389 = vpop.f32.mrf.mxu0
    %v390 = vadd.f32 %v298, %v389
    %391 = vmatmul.bf16.gmra.mxu0 %v279
    %v392 = vpop.f32.mrf.mxu0
    %v393 = vadd.f32 %v298, %v392
    %v394 = vpop.f32.mrf.mxu0
    %v395 = vadd.f32 %v298, %v394
    %396 = vdwg.mxu0
    %v397 = vmax.f32 %v358, 0.0
    %v398 = vmax.f32 %v360, 0.0
    %v399 = vmax.f32 %v363, 0.0
    %v400 = vmax.f32 %v365, 0.0
    %v401 = vmax.f32 %v368, 0.0
    %v402 = vmax.f32 %v370, 0.0
    %v403 = vmax.f32 %v373, 0.0
    %v404 = vmax.f32 %v375, 0.0
    %v405 = vmax.f32 %v378, 0.0
    %v406 = vmax.f32 %v380, 0.0
    %v407 = vmax.f32 %v383, 0.0
    %v408 = vmax.f32 %v385, 0.0
    %v409 = vmax.f32 %v388, 0.0
    %v410 = vmax.f32 %v390, 0.0
    %v411 = vmax.f32 %v393, 0.0
    %v412 = vmax.f32 %v395, 0.0
    %v413 = vpack.c.bf16 %v398, %v397
    %v414 = vpack.c.bf16 %v400, %v399
    %v415 = vpack.c.bf16 %v402, %v401
    %v416 = vpack.c.bf16 %v404, %v403
    %v417 = vpack.c.bf16 %v406, %v405
    %v418 = vpack.c.bf16 %v408, %v407
    %v419 = vpack.c.bf16 %v410, %v409
    %v420 = vpack.c.bf16 %v412, %v411
    %v421 = vld [vmem:[%s5] sm:$0x1]
    %s422 = sld [smem:[#allocation2]]
    %v423 = vstv %s422
    %424 = vmatpush.bf16.xpose.msra.mxu0 %v420
    %425 = vmatpush.bf16.xpose.msra.mxu0 %v419
    %426 = vmatpush.bf16.xpose.msra.mxu0 %v418
    %427 = vmatpush.bf16.xpose.msra.mxu0 %v417
    %428 = vmatpush.bf16.xpose.msra.mxu0 %v416
    %429 = vmatpush.bf16.xpose.msra.mxu0 %v415
    %430 = vmatpush.bf16.xpose.msra.mxu0 %v414
    %431 = vmatpush.bf16.xpose.msra.mxu0 %v413
    %432 = vmatmul.bf16.gmra.mxu0 %v421
    %v433 = vpop.f32.mrf.mxu0
    %v434 = vadd.f32 %v423, %v433
    %v435 = vpop.f32.mrf.mxu0
    %436 = vdwg.mxu0
    %v437 = vsub.f32 0.0, %v434
    %v438 = vmul.f32 %v437, 1.442695
    %v439 = vpow.pop %v438
    %v440 = vadd.f32 %v439, 1.0
    %v441 = vrcp.pop %v440
    %442 = vst [vmem:[#allocation9] sm:$0x1] %v441
    // Predicated region
    $region42: #{tpu_custom_call.1} parent=1 // pred_check
      _
    $region43: #{tpu_custom_call.1} parent=1 // pred_check_branch
      %444 = sbr.rel (0) target = $region45
    $region44: #{tpu_custom_call.1} parent=1 // pred_region
      %446 = vsyncadd [#allocation5], 0
      %s448 = sshll.u32 [#allocation9], 4
      %s449 = int_to_ptr.vmem [resolvable:$true] %s448
      %s450 = sshll.u32 %s7, 4
      %s451 = int_to_ptr.hbm [resolvable:$true] %s450
      %453 = dma.vmem_to_hbm [thread:$0]  %s449, 16, %s451, [#allocation5]
    $region45: #{tpu_custom_call.1} parent=1 // pred_fallthru
      _
    // Predicated region
    $region46: #{tpu_custom_call.1} parent=1 // pred_check
      _
    $region47: #{tpu_custom_call.1} parent=1 // pred_check_branch
      %455 = sbr.rel (0) target = $region49
    $region48: #{tpu_custom_call.1} parent=1 // pred_region
      %457 = dma.done [#allocation5], 16
    $region49: #{tpu_custom_call.1} parent=1 // pred_fallthru
      _
    %458 = vsyncpa [#allocation4], 1
    %459 = vsyncpa [#allocation7], 1
    %460 = vsyncpa [#allocation5], 1

</llo_original>
